<compile_context>
chip_gen: v7x
topology: tpu7x:2x2x1
jax: 0.10.0
libtpu: 0.0.40
codegen_flags: <defaults>
</compile_context>

<pallas_src>
import math

import jax
import jax.numpy as jnp
from jax import lax
from jax.experimental import pallas as pl
from jax.experimental.pallas import tpu as pltpu

N_KNOTS = 10  # torch.linspace(-1, 1, 10)


# ----------------------------- kernel ---------------------------------------
def _gelu_tanh(x):
    # torch nn.GELU(approximate='tanh')
    c = jnp.float32(math.sqrt(2.0 / math.pi))
    return 0.5 * x * (1.0 + jnp.tanh(c * (x + jnp.float32(0.044715) * x * x * x)))


def kan_kernel(x_ref, cmean1_ref, cmean2_ref, knots1_ref, knots2_ref, o_ref):
    # x_ref/o_ref: (n_chunks, 8, Ep)   VMEM tile
    # cmeanX_ref : (K, 8, Ep)          VMEM, sublane-pre-broadcast in wrapper
    # knotsX_ref : (K,)                SMEM scalars
    n_chunks, _, ep = x_ref.shape
    k_total = cmean1_ref.shape[0]

    # Hoist SMEM knot scalars out of the chunk loop.
    kn1 = [knots1_ref[k] for k in range(k_total)]
    kn2 = [knots2_ref[k] for k in range(k_total)]

    # cmean rows are already (8, Ep) sublane-replicated, so consuming them is a
    # plain vld with no broadcast_in_dim.  Hoist into vregs when they fit
    # comfortably; otherwise keep them in VMEM (vld slots have slack, vregs don't).
    cmean_vregs = 2 * k_total * pl.cdiv(ep, 128)
    if cmean_vregs <= 24:
        c1_all = cmean1_ref[...]
        c2_all = cmean2_ref[...]
        load_c1 = lambda k: c1_all[k]
        load_c2 = lambda k: c2_all[k]
    else:
        load_c1 = lambda k: cmean1_ref[k]
        load_c2 = lambda k: cmean2_ref[k]

    def spline(v, kn, load_c):
        acc = jnp.abs(v - kn[0]) * load_c(0)
        for k in range(1, k_total):          # K static -> fully unrolled
            acc = acc + jnp.abs(v - kn[k]) * load_c(k)
        return acc

    def emit_chunk(r):
        xv = x_ref[r].astype(jnp.float32)                 # (8, Ep)
        h = _gelu_tanh(spline(xv, kn1, load_c1))          # spline1 + GELU
        o_ref[r] = spline(h, kn2, load_c2).astype(o_ref.dtype)

    if n_chunks <= 8:
        # Tiny tile: full static unroll, no loop overhead.
        for r in range(n_chunks):
            emit_chunk(r)
    else:
        unroll = 4 if n_chunks % 4 == 0 else (2 if n_chunks % 2 == 0 else 1)

        def body(i, carry):
            for u in range(unroll):
                emit_chunk(i * unroll + u)
            return carry

        lax.fori_loop(0, n_chunks // unroll, body, 0)
        for r in range(n_chunks - n_chunks % unroll, n_chunks):  # (empty by construction)
            emit_chunk(r)


# ----------------------------- wrapper ---------------------------------------
def kan_forward(x, knots1, coeffs1, knots2, coeffs2, *, block_rows=2048):
    B, E = x.shape
    K = knots1.shape[0]
    io_dtype = x.dtype
    io_bytes = x.dtype.itemsize

    # Batch-invariant pre-reduction over j: cmean[k, i] = mean_j coeffs[i, j, k].
    cmean1 = jnp.transpose(jnp.mean(coeffs1.astype(jnp.float32), axis=1))  # (K, E)
    cmean2 = jnp.transpose(jnp.mean(coeffs2.astype(jnp.float32), axis=1))

    # ---- lane-dense feature layout ------------------------------------------
    # Pad E up to Ef (a divisor of 128 for small E, a multiple of 128 otherwise)
    # and pack `pack` batch rows side by side so Ep is always a multiple of 128.
    if E <= 128:
        Ef = min(128, max(1, pl.next_power_of_2(E)))
        pack = 128 // Ef
    else:
        Ef = pl.cdiv(E, 128) * 128
        pack = 1
    Ep = Ef * pack

    if Ef != E:
        x = jnp.pad(x, ((0, 0), (0, Ef - E)))
        cmean1 = jnp.pad(cmean1, ((0, 0), (0, Ef - E)))
        cmean2 = jnp.pad(cmean2, ((0, 0), (0, Ef - E)))

    # ---- batch tiling --------------------------------------------------------
    rows_per_chunk = 8 * pack                         # raw rows per (8, Ep) chunk
    n_chunks = pl.cdiv(B, rows_per_chunk)

    chunk_bytes = 8 * Ep * io_bytes
    tc_budget = max(1, (10 << 20) // (4 * chunk_bytes))   # 2x in + 2x out buffers
    tc = max(1, min(block_rows // 8, tc_budget, n_chunks))
    if n_chunks >= 4:
        # Keep >= 4 grid steps: pipelining overlap + both v7x TensorCores busy.
        tc = min(tc, pl.cdiv(n_chunks, 4))
    grid = pl.cdiv(n_chunks, tc)
    n_chunks_pad = grid * tc                          # pad instead of full-batch fallback

    B_pad = n_chunks_pad * 8 * pack
    if B_pad != B:
        x = jnp.pad(x, ((0, B_pad - B), (0, 0)))
    x3 = x.reshape(n_chunks_pad, 8, Ep)

    # cmean packed along lanes and replicated along sublanes: (K, 8, Ep).
    c1 = jnp.broadcast_to(jnp.tile(cmean1, (1, pack))[:, None, :], (K, 8, Ep))
    c2 = jnp.broadcast_to(jnp.tile(cmean2, (1, pack))[:, None, :], (K, 8, Ep))

    # Explicit VMEM budget: double-buffered x/out + both cmean blocks + slack.
    tile_bytes = tc * 8 * Ep * io_bytes
    cmean_bytes = K * 8 * Ep * 4
    vmem_need = 4 * tile_bytes + 4 * cmean_bytes + (2 << 20)
    vmem_limit = int(max(vmem_need, 32 << 20))        # fits every generation's VMEM

    out = pl.pallas_call(
        kan_kernel,
        out_shape=jax.ShapeDtypeStruct((n_chunks_pad, 8, Ep), io_dtype),
        grid=(grid,),
        in_specs=[
            pl.BlockSpec((tc, 8, Ep), lambda i: (i, 0, 0)),          # x: streamed
            pl.BlockSpec((K, 8, Ep), lambda i: (0, 0, 0)),           # cmean1: resident
            pl.BlockSpec((K, 8, Ep), lambda i: (0, 0, 0)),           # cmean2: resident
            pl.BlockSpec(memory_space=pltpu.MemorySpace.SMEM),       # knots1 scalars
            pl.BlockSpec(memory_space=pltpu.MemorySpace.SMEM),       # knots2 scalars
        ],
        out_specs=pl.BlockSpec((tc, 8, Ep), lambda i: (i, 0, 0)),
        compiler_params=pltpu.CompilerParams(
            dimension_semantics=("parallel",),
            vmem_limit_bytes=vmem_limit),
    )(x3, c1, c2, knots1.astype(jnp.float32), knots2.astype(jnp.float32))

    return out.reshape(B_pad, Ef)[:B, :E]


# ----------------------------- pure-JAX reference ----------------------------
def _spline_ref(x, knots, coeffs):
    basis = jnp.abs(x[:, :, None] - knots[None, None, :])            # (B, E, K)
    out = jnp.einsum("bik,ijk->bij", basis, coeffs,
                     precision=lax.Precision.HIGHEST)                # (B, E, E)
    return out.mean(axis=-1)                                         # (B, E)


def kan_ref(x, knots1, coeffs1, knots2, coeffs2):
    h = _spline_ref(x, knots1, coeffs1)
    h = _gelu_tanh(h)
    return _spline_ref(h, knots2, coeffs2)


# ----------------------------- main ------------------------------------------
if __name__ == "__main__":
    B, E = 16, 32  # batch, n_embd

    key = jax.random.PRNGKey(0)
    kx, k1, k2 = jax.random.split(key, 3)

    x = jax.random.normal(kx, (B, E), dtype=jnp.float32)
    knots1 = jnp.linspace(-1.0, 1.0, N_KNOTS, dtype=jnp.float32)      # nn.Parameter linspace
    knots2 = jnp.linspace(-1.0, 1.0, N_KNOTS, dtype=jnp.float32)
    coeffs1 = jax.random.normal(k1, (E, E, N_KNOTS), dtype=jnp.float32)
    coeffs2 = jax.random.normal(k2, (E, E, N_KNOTS), dtype=jnp.float32)

    out = kan_forward(x, knots1, coeffs1, knots2, coeffs2)
    out = jax.block_until_ready(out)

    ref = kan_ref(x, knots1, coeffs1, knots2, coeffs2)
    assert out.shape == (B, E) and out.dtype == jnp.float32
    if not jnp.allclose(out, ref, rtol=2e-3, atol=2e-3):
        raise AssertionError(
            f"kernel mismatch, max abs err = {jnp.max(jnp.abs(out - ref))}")

    print("KERNEL_OK")
</pallas_src>

<mosaic_0001>
module attributes {stable_mosaic.version = 11 : i64} {
  func.func @kan_kernel(%arg0: i32, %arg1: memref<1x8x128xf32, #tpu.memory_space<vmem>>, %arg2: memref<10x8x128xf32, #tpu.memory_space<vmem>>, %arg3: memref<10x8x128xf32, #tpu.memory_space<vmem>>, %arg4: memref<10xf32, #tpu.memory_space<smem>>, %arg5: memref<10xf32, #tpu.memory_space<smem>>, %arg6: memref<1x8x128xf32, #tpu.memory_space<vmem>>) attributes {dimension_semantics = [#tpu.dimension_semantics<parallel>], iteration_bounds = array<i64: 1>, scalar_prefetch = 0 : i64, scratch_operands = 0 : i64, tpu.core_type = #tpu.core_type<tc>, window_params = [{transform_indices = @transform_0, window_bounds = array<i64: 1, 8, 128>}, {pipeline_mode = #tpu.pipeline_mode<synchronous>, transform_indices = @transform_1, window_bounds = array<i64: 10, 8, 128>}, {pipeline_mode = #tpu.pipeline_mode<synchronous>, transform_indices = @transform_2, window_bounds = array<i64: 10, 8, 128>}, {transform_indices = @transform_3, window_bounds = array<i64: 10>}, {transform_indices = @transform_4, window_bounds = array<i64: 10>}, {transform_indices = @transform_5, window_bounds = array<i64: 1, 8, 128>}]} {
    %c0 = arith.constant 0 : index
    %0 = memref.load %arg4[%c0] : memref<10xf32, #tpu.memory_space<smem>>
    %c1 = arith.constant 1 : index
    %1 = memref.load %arg4[%c1] : memref<10xf32, #tpu.memory_space<smem>>
    %c2 = arith.constant 2 : index
    %2 = memref.load %arg4[%c2] : memref<10xf32, #tpu.memory_space<smem>>
    %c3 = arith.constant 3 : index
    %3 = memref.load %arg4[%c3] : memref<10xf32, #tpu.memory_space<smem>>
    %c4 = arith.constant 4 : index
    %4 = memref.load %arg4[%c4] : memref<10xf32, #tpu.memory_space<smem>>
    %c5 = arith.constant 5 : index
    %5 = memref.load %arg4[%c5] : memref<10xf32, #tpu.memory_space<smem>>
    %c6 = arith.constant 6 : index
    %6 = memref.load %arg4[%c6] : memref<10xf32, #tpu.memory_space<smem>>
    %c7 = arith.constant 7 : index
    %7 = memref.load %arg4[%c7] : memref<10xf32, #tpu.memory_space<smem>>
    %c8 = arith.constant 8 : index
    %8 = memref.load %arg4[%c8] : memref<10xf32, #tpu.memory_space<smem>>
    %c9 = arith.constant 9 : index
    %9 = memref.load %arg4[%c9] : memref<10xf32, #tpu.memory_space<smem>>
    %c0_0 = arith.constant 0 : index
    %10 = memref.load %arg5[%c0_0] : memref<10xf32, #tpu.memory_space<smem>>
    %c1_1 = arith.constant 1 : index
    %11 = memref.load %arg5[%c1_1] : memref<10xf32, #tpu.memory_space<smem>>
    %c2_2 = arith.constant 2 : index
    %12 = memref.load %arg5[%c2_2] : memref<10xf32, #tpu.memory_space<smem>>
    %c3_3 = arith.constant 3 : index
    %13 = memref.load %arg5[%c3_3] : memref<10xf32, #tpu.memory_space<smem>>
    %c4_4 = arith.constant 4 : index
    %14 = memref.load %arg5[%c4_4] : memref<10xf32, #tpu.memory_space<smem>>
    %c5_5 = arith.constant 5 : index
    %15 = memref.load %arg5[%c5_5] : memref<10xf32, #tpu.memory_space<smem>>
    %c6_6 = arith.constant 6 : index
    %16 = memref.load %arg5[%c6_6] : memref<10xf32, #tpu.memory_space<smem>>
    %c7_7 = arith.constant 7 : index
    %17 = memref.load %arg5[%c7_7] : memref<10xf32, #tpu.memory_space<smem>>
    %c8_8 = arith.constant 8 : index
    %18 = memref.load %arg5[%c8_8] : memref<10xf32, #tpu.memory_space<smem>>
    %c9_9 = arith.constant 9 : index
    %19 = memref.load %arg5[%c9_9] : memref<10xf32, #tpu.memory_space<smem>>
    %c0_10 = arith.constant 0 : index
    %c0_11 = arith.constant 0 : index
    %c0_12 = arith.constant 0 : index
    %20 = vector.load %arg2[%c0_10, %c0_11, %c0_12] : memref<10x8x128xf32, #tpu.memory_space<vmem>>, vector<10x8x128xf32>
    %c0_13 = arith.constant 0 : index
    %c0_14 = arith.constant 0 : index
    %c0_15 = arith.constant 0 : index
    %21 = vector.load %arg3[%c0_13, %c0_14, %c0_15] : memref<10x8x128xf32, #tpu.memory_space<vmem>>, vector<10x8x128xf32>
    %c0_16 = arith.constant 0 : index
    %c0_17 = arith.constant 0 : index
    %c0_18 = arith.constant 0 : index
    %22 = vector.load %arg1[%c0_16, %c0_17, %c0_18] : memref<1x8x128xf32, #tpu.memory_space<vmem>>, vector<1x8x128xf32>
    %23 = vector.shape_cast %22 : vector<1x8x128xf32> to vector<8x128xf32>
    %24 = vector.broadcast %0 : f32 to vector<8x128xf32>
    %25 = arith.subf %23, %24 : vector<8x128xf32>
    %26 = math.absf %25 : vector<8x128xf32>
    %27 = vector.extract_strided_slice %20 {offsets = [0, 0, 0], sizes = [1, 8, 128], strides = [1, 1, 1]} : vector<10x8x128xf32> to vector<1x8x128xf32>
    %28 = vector.shape_cast %27 : vector<1x8x128xf32> to vector<8x128xf32>
    %29 = arith.mulf %26, %28 : vector<8x128xf32>
    %30 = vector.broadcast %1 : f32 to vector<8x128xf32>
    %31 = arith.subf %23, %30 : vector<8x128xf32>
    %32 = math.absf %31 : vector<8x128xf32>
    %33 = vector.extract_strided_slice %20 {offsets = [1, 0, 0], sizes = [1, 8, 128], strides = [1, 1, 1]} : vector<10x8x128xf32> to vector<1x8x128xf32>
    %34 = vector.shape_cast %33 : vector<1x8x128xf32> to vector<8x128xf32>
    %35 = arith.mulf %32, %34 : vector<8x128xf32>
    %36 = arith.addf %29, %35 : vector<8x128xf32>
    %37 = vector.broadcast %2 : f32 to vector<8x128xf32>
    %38 = arith.subf %23, %37 : vector<8x128xf32>
    %39 = math.absf %38 : vector<8x128xf32>
    %40 = vector.extract_strided_slice %20 {offsets = [2, 0, 0], sizes = [1, 8, 128], strides = [1, 1, 1]} : vector<10x8x128xf32> to vector<1x8x128xf32>
    %41 = vector.shape_cast %40 : vector<1x8x128xf32> to vector<8x128xf32>
    %42 = arith.mulf %39, %41 : vector<8x128xf32>
    %43 = arith.addf %36, %42 : vector<8x128xf32>
    %44 = vector.broadcast %3 : f32 to vector<8x128xf32>
    %45 = arith.subf %23, %44 : vector<8x128xf32>
    %46 = math.absf %45 : vector<8x128xf32>
    %47 = vector.extract_strided_slice %20 {offsets = [3, 0, 0], sizes = [1, 8, 128], strides = [1, 1, 1]} : vector<10x8x128xf32> to vector<1x8x128xf32>
    %48 = vector.shape_cast %47 : vector<1x8x128xf32> to vector<8x128xf32>
    %49 = arith.mulf %46, %48 : vector<8x128xf32>
    %50 = arith.addf %43, %49 : vector<8x128xf32>
    %51 = vector.broadcast %4 : f32 to vector<8x128xf32>
    %52 = arith.subf %23, %51 : vector<8x128xf32>
    %53 = math.absf %52 : vector<8x128xf32>
    %54 = vector.extract_strided_slice %20 {offsets = [4, 0, 0], sizes = [1, 8, 128], strides = [1, 1, 1]} : vector<10x8x128xf32> to vector<1x8x128xf32>
    %55 = vector.shape_cast %54 : vector<1x8x128xf32> to vector<8x128xf32>
    %56 = arith.mulf %53, %55 : vector<8x128xf32>
    %57 = arith.addf %50, %56 : vector<8x128xf32>
    %58 = vector.broadcast %5 : f32 to vector<8x128xf32>
    %59 = arith.subf %23, %58 : vector<8x128xf32>
    %60 = math.absf %59 : vector<8x128xf32>
    %61 = vector.extract_strided_slice %20 {offsets = [5, 0, 0], sizes = [1, 8, 128], strides = [1, 1, 1]} : vector<10x8x128xf32> to vector<1x8x128xf32>
    %62 = vector.shape_cast %61 : vector<1x8x128xf32> to vector<8x128xf32>
    %63 = arith.mulf %60, %62 : vector<8x128xf32>
    %64 = arith.addf %57, %63 : vector<8x128xf32>
    %65 = vector.broadcast %6 : f32 to vector<8x128xf32>
    %66 = arith.subf %23, %65 : vector<8x128xf32>
    %67 = math.absf %66 : vector<8x128xf32>
    %68 = vector.extract_strided_slice %20 {offsets = [6, 0, 0], sizes = [1, 8, 128], strides = [1, 1, 1]} : vector<10x8x128xf32> to vector<1x8x128xf32>
    %69 = vector.shape_cast %68 : vector<1x8x128xf32> to vector<8x128xf32>
    %70 = arith.mulf %67, %69 : vector<8x128xf32>
    %71 = arith.addf %64, %70 : vector<8x128xf32>
    %72 = vector.broadcast %7 : f32 to vector<8x128xf32>
    %73 = arith.subf %23, %72 : vector<8x128xf32>
    %74 = math.absf %73 : vector<8x128xf32>
    %75 = vector.extract_strided_slice %20 {offsets = [7, 0, 0], sizes = [1, 8, 128], strides = [1, 1, 1]} : vector<10x8x128xf32> to vector<1x8x128xf32>
    %76 = vector.shape_cast %75 : vector<1x8x128xf32> to vector<8x128xf32>
    %77 = arith.mulf %74, %76 : vector<8x128xf32>
    %78 = arith.addf %71, %77 : vector<8x128xf32>
    %79 = vector.broadcast %8 : f32 to vector<8x128xf32>
    %80 = arith.subf %23, %79 : vector<8x128xf32>
    %81 = math.absf %80 : vector<8x128xf32>
    %82 = vector.extract_strided_slice %20 {offsets = [8, 0, 0], sizes = [1, 8, 128], strides = [1, 1, 1]} : vector<10x8x128xf32> to vector<1x8x128xf32>
    %83 = vector.shape_cast %82 : vector<1x8x128xf32> to vector<8x128xf32>
    %84 = arith.mulf %81, %83 : vector<8x128xf32>
    %85 = arith.addf %78, %84 : vector<8x128xf32>
    %86 = vector.broadcast %9 : f32 to vector<8x128xf32>
    %87 = arith.subf %23, %86 : vector<8x128xf32>
    %88 = math.absf %87 : vector<8x128xf32>
    %89 = vector.extract_strided_slice %20 {offsets = [9, 0, 0], sizes = [1, 8, 128], strides = [1, 1, 1]} : vector<10x8x128xf32> to vector<1x8x128xf32>
    %90 = vector.shape_cast %89 : vector<1x8x128xf32> to vector<8x128xf32>
    %91 = arith.mulf %88, %90 : vector<8x128xf32>
    %92 = arith.addf %85, %91 : vector<8x128xf32>
    %cst = arith.constant 5.000000e-01 : f32
    %93 = vector.broadcast %cst : f32 to vector<8x128xf32>
    %94 = arith.mulf %93, %92 : vector<8x128xf32>
    %cst_19 = arith.constant 4.471500e-02 : f32
    %95 = vector.broadcast %cst_19 : f32 to vector<8x128xf32>
    %96 = arith.mulf %95, %92 : vector<8x128xf32>
    %97 = arith.mulf %96, %92 : vector<8x128xf32>
    %98 = arith.mulf %97, %92 : vector<8x128xf32>
    %99 = arith.addf %92, %98 : vector<8x128xf32>
    %cst_20 = arith.constant 0.797884583 : f32
    %100 = vector.broadcast %cst_20 : f32 to vector<8x128xf32>
    %101 = arith.mulf %100, %99 : vector<8x128xf32>
    %102 = math.tanh %101 : vector<8x128xf32>
    %cst_21 = arith.constant 1.000000e+00 : f32
    %103 = vector.broadcast %cst_21 : f32 to vector<8x128xf32>
    %104 = arith.addf %103, %102 : vector<8x128xf32>
    %105 = arith.mulf %94, %104 : vector<8x128xf32>
    %106 = vector.broadcast %10 : f32 to vector<8x128xf32>
    %107 = arith.subf %105, %106 : vector<8x128xf32>
    %108 = math.absf %107 : vector<8x128xf32>
    %109 = vector.extract_strided_slice %21 {offsets = [0, 0, 0], sizes = [1, 8, 128], strides = [1, 1, 1]} : vector<10x8x128xf32> to vector<1x8x128xf32>
    %110 = vector.shape_cast %109 : vector<1x8x128xf32> to vector<8x128xf32>
    %111 = arith.mulf %108, %110 : vector<8x128xf32>
    %112 = vector.broadcast %11 : f32 to vector<8x128xf32>
    %113 = arith.subf %105, %112 : vector<8x128xf32>
    %114 = math.absf %113 : vector<8x128xf32>
    %115 = vector.extract_strided_slice %21 {offsets = [1, 0, 0], sizes = [1, 8, 128], strides = [1, 1, 1]} : vector<10x8x128xf32> to vector<1x8x128xf32>
    %116 = vector.shape_cast %115 : vector<1x8x128xf32> to vector<8x128xf32>
    %117 = arith.mulf %114, %116 : vector<8x128xf32>
    %118 = arith.addf %111, %117 : vector<8x128xf32>
    %119 = vector.broadcast %12 : f32 to vector<8x128xf32>
    %120 = arith.subf %105, %119 : vector<8x128xf32>
    %121 = math.absf %120 : vector<8x128xf32>
    %122 = vector.extract_strided_slice %21 {offsets = [2, 0, 0], sizes = [1, 8, 128], strides = [1, 1, 1]} : vector<10x8x128xf32> to vector<1x8x128xf32>
    %123 = vector.shape_cast %122 : vector<1x8x128xf32> to vector<8x128xf32>
    %124 = arith.mulf %121, %123 : vector<8x128xf32>
    %125 = arith.addf %118, %124 : vector<8x128xf32>
    %126 = vector.broadcast %13 : f32 to vector<8x128xf32>
    %127 = arith.subf %105, %126 : vector<8x128xf32>
    %128 = math.absf %127 : vector<8x128xf32>
    %129 = vector.extract_strided_slice %21 {offsets = [3, 0, 0], sizes = [1, 8, 128], strides = [1, 1, 1]} : vector<10x8x128xf32> to vector<1x8x128xf32>
    %130 = vector.shape_cast %129 : vector<1x8x128xf32> to vector<8x128xf32>
    %131 = arith.mulf %128, %130 : vector<8x128xf32>
    %132 = arith.addf %125, %131 : vector<8x128xf32>
    %133 = vector.broadcast %14 : f32 to vector<8x128xf32>
    %134 = arith.subf %105, %133 : vector<8x128xf32>
    %135 = math.absf %134 : vector<8x128xf32>
    %136 = vector.extract_strided_slice %21 {offsets = [4, 0, 0], sizes = [1, 8, 128], strides = [1, 1, 1]} : vector<10x8x128xf32> to vector<1x8x128xf32>
    %137 = vector.shape_cast %136 : vector<1x8x128xf32> to vector<8x128xf32>
    %138 = arith.mulf %135, %137 : vector<8x128xf32>
    %139 = arith.addf %132, %138 : vector<8x128xf32>
    %140 = vector.broadcast %15 : f32 to vector<8x128xf32>
    %141 = arith.subf %105, %140 : vector<8x128xf32>
    %142 = math.absf %141 : vector<8x128xf32>
    %143 = vector.extract_strided_slice %21 {offsets = [5, 0, 0], sizes = [1, 8, 128], strides = [1, 1, 1]} : vector<10x8x128xf32> to vector<1x8x128xf32>
    %144 = vector.shape_cast %143 : vector<1x8x128xf32> to vector<8x128xf32>
    %145 = arith.mulf %142, %144 : vector<8x128xf32>
    %146 = arith.addf %139, %145 : vector<8x128xf32>
    %147 = vector.broadcast %16 : f32 to vector<8x128xf32>
    %148 = arith.subf %105, %147 : vector<8x128xf32>
    %149 = math.absf %148 : vector<8x128xf32>
    %150 = vector.extract_strided_slice %21 {offsets = [6, 0, 0], sizes = [1, 8, 128], strides = [1, 1, 1]} : vector<10x8x128xf32> to vector<1x8x128xf32>
    %151 = vector.shape_cast %150 : vector<1x8x128xf32> to vector<8x128xf32>
    %152 = arith.mulf %149, %151 : vector<8x128xf32>
    %153 = arith.addf %146, %152 : vector<8x128xf32>
    %154 = vector.broadcast %17 : f32 to vector<8x128xf32>
    %155 = arith.subf %105, %154 : vector<8x128xf32>
    %156 = math.absf %155 : vector<8x128xf32>
    %157 = vector.extract_strided_slice %21 {offsets = [7, 0, 0], sizes = [1, 8, 128], strides = [1, 1, 1]} : vector<10x8x128xf32> to vector<1x8x128xf32>
    %158 = vector.shape_cast %157 : vector<1x8x128xf32> to vector<8x128xf32>
    %159 = arith.mulf %156, %158 : vector<8x128xf32>
    %160 = arith.addf %153, %159 : vector<8x128xf32>
    %161 = vector.broadcast %18 : f32 to vector<8x128xf32>
    %162 = arith.subf %105, %161 : vector<8x128xf32>
    %163 = math.absf %162 : vector<8x128xf32>
    %164 = vector.extract_strided_slice %21 {offsets = [8, 0, 0], sizes = [1, 8, 128], strides = [1, 1, 1]} : vector<10x8x128xf32> to vector<1x8x128xf32>
    %165 = vector.shape_cast %164 : vector<1x8x128xf32> to vector<8x128xf32>
    %166 = arith.mulf %163, %165 : vector<8x128xf32>
    %167 = arith.addf %160, %166 : vector<8x128xf32>
    %168 = vector.broadcast %19 : f32 to vector<8x128xf32>
    %169 = arith.subf %105, %168 : vector<8x128xf32>
    %170 = math.absf %169 : vector<8x128xf32>
    %171 = vector.extract_strided_slice %21 {offsets = [9, 0, 0], sizes = [1, 8, 128], strides = [1, 1, 1]} : vector<10x8x128xf32> to vector<1x8x128xf32>
    %172 = vector.shape_cast %171 : vector<1x8x128xf32> to vector<8x128xf32>
    %173 = arith.mulf %170, %172 : vector<8x128xf32>
    %174 = arith.addf %167, %173 : vector<8x128xf32>
    %c0_22 = arith.constant 0 : index
    %c0_23 = arith.constant 0 : index
    %c0_24 = arith.constant 0 : index
    %175 = vector.load %arg6[%c0_22, %c0_23, %c0_24] : memref<1x8x128xf32, #tpu.memory_space<vmem>>, vector<1x8x128xf32>
    %176 = vector.shape_cast %175 : vector<1x8x128xf32> to vector<8x128xf32>
    %177 = vector.shape_cast %174 : vector<8x128xf32> to vector<1x8x128xf32>
    tpu.vector_store %arg6[%c0_22, %c0_23, %c0_24], %177 {strides = array<i32>} : memref<1x8x128xf32, #tpu.memory_space<vmem>>, vector<1x8x128xf32>,
    return
  }
  func.func @transform_0(%arg0: i32) -> (i32, i32, i32) {
    %c0_i32 = arith.constant 0 : i32
    %c0_i32_0 = arith.constant 0 : i32
    %c0_i32_1 = arith.constant 0 : i32
    return %arg0, %c0_i32, %c0_i32_0 : i32, i32, i32
  }
  func.func @transform_1(%arg0: i32) -> (i32, i32, i32) {
    %c0_i32 = arith.constant 0 : i32
    %c0_i32_0 = arith.constant 0 : i32
    %c0_i32_1 = arith.constant 0 : i32
    %c0_i32_2 = arith.constant 0 : i32
    return %c0_i32, %c0_i32_0, %c0_i32_1 : i32, i32, i32
  }
  func.func @transform_2(%arg0: i32) -> (i32, i32, i32) {
    %c0_i32 = arith.constant 0 : i32
    %c0_i32_0 = arith.constant 0 : i32
    %c0_i32_1 = arith.constant 0 : i32
    %c0_i32_2 = arith.constant 0 : i32
    return %c0_i32, %c0_i32_0, %c0_i32_1 : i32, i32, i32
  }
  func.func @transform_3(%arg0: i32) -> i32 {
    %c0_i32 = arith.constant 0 : i32
    %c0_i32_0 = arith.constant 0 : i32
    return %c0_i32 : i32
  }
  func.func @transform_4(%arg0: i32) -> i32 {
    %c0_i32 = arith.constant 0 : i32
    %c0_i32_0 = arith.constant 0 : i32
    return %c0_i32 : i32
  }
  func.func @transform_5(%arg0: i32) -> (i32, i32, i32) {
    %c0_i32 = arith.constant 0 : i32
    %c0_i32_0 = arith.constant 0 : i32
    %c0_i32_1 = arith.constant 0 : i32
    return %arg0, %c0_i32, %c0_i32_0 : i32, i32, i32
  }
}

</mosaic_0001>

<llo_original>
// kernel: tpu_custom_call.1
$region0: #{tpu_custom_call.1}
  #allocation0 [shape = 'u32[]', space=smem, size = 0x4, offset = 0x4, fixed_abs, tag = 'smem constant byte address 0x4 - core index']
  #allocation1 [shape = 'u32[144,128]{1,0:T(1,128)}', space=vmem, size = 0x12000, scoped, tag = 'internal scratch']
  %s0 = inlined_call_operand.hbm [shape: f32[1,8,128], index: 0, kind: input, shape index: {}]
  %s1 = inlined_call_operand.hbm [shape: f32[10,8,128], index: 1, kind: input, shape index: {}]
  %s2 = inlined_call_operand.hbm [shape: f32[10,8,128], index: 2, kind: input, shape index: {}]
  %s3 = inlined_call_operand.vmem [shape: f32[10], index: 3, kind: input, shape index: {}]
  %s4 = inlined_call_operand.vmem [shape: f32[10], index: 4, kind: input, shape index: {}]
  %s5 = inlined_call_operand.hbm [shape: f32[1,8,128], index: 5, kind: output, shape index: {}]
  %s6 = sld [smem:[#allocation0]]
  $region50: #{tpu_custom_call.1} parent=0
    _
  %s8 = ssub.s32 1, %s6
  %s9 = scalar_select 0, %s8, %s6
  $region1: #{tpu_custom_call.1} parent=0
    #allocation2 [shape = 'u8[4096]{0}', space=vmem, size = 0x1000, scoped, tag = 'input window, operand 0, single buffered']
    #allocation3 [shape = 's32[1]{0}', space=sflag, size = 0x4, scoped, tag = 'scoped memory for tpu_custom_call.1']
    #allocation4 [shape = 's32[1]{0}', space=sflag, size = 0x4, scoped, tag = 'scoped memory for tpu_custom_call.1']
    #allocation5 [shape = 's32[1]{0}', space=sflag, size = 0x4, scoped, tag = 'scoped memory for tpu_custom_call.1']
    #allocation6 [shape = 'u8[40960]{0}', space=vmem, size = 0xa000, scoped, tag = 'input window, operand 1, single buffered']
    #allocation7 [shape = 's32[1]{0}', space=sflag, size = 0x4, scoped, tag = 'scoped memory for tpu_custom_call.1']
    #allocation8 [shape = 'u8[40960]{0}', space=vmem, size = 0xa000, scoped, tag = 'input window, operand 2, single buffered']
    #allocation9 [shape = 'u8[512]{0}', space=smem, size = 0x200, scoped, tag = 'input window, operand 3, single buffered']
    #allocation10 [shape = 'u8[512]{0}', space=smem, size = 0x200, scoped, tag = 'input window, operand 4, single buffered']
    #allocation11 [shape = 's32[1]{0}', space=sflag, size = 0x4, scoped, tag = 'scoped memory for tpu_custom_call.1']
    #allocation12 [shape = 'u8[4096]{0}', space=vmem, size = 0x1000, scoped, tag = 'output window, operand 0, single buffered']
    %10 = vsyncpa [#allocation3], 0
    %11 = vsyncpa [#allocation7], 0
    %12 = vsyncpa [#allocation5], 0
    %13 = vsyncpa [#allocation11], 0
    %14 = vsyncpa [#allocation4], 0
    // Predicated region
    $region2: #{tpu_custom_call.1} parent=1 // pred_check
      _
    $region3: #{tpu_custom_call.1} parent=1 // pred_check_branch
      %16 = sbr.rel (0) target = $region5
    $region4: #{tpu_custom_call.1} parent=1 // pred_region
      %s18 = ssub.s32 128, 128
      %19 = vsyncadd [#allocation3], %s18
      %s21 = sshll.u32 [#allocation2], 4
      %s22 = int_to_ptr.vmem [resolvable:$true] %s21
      %24 = dma.hbm_to_vmem [thread:$0]  %s0, 128, %s22, [#allocation3]
    $region5: #{tpu_custom_call.1} parent=1 // pred_fallthru
      _
    // Predicated region
    $region6: #{tpu_custom_call.1} parent=1 // pred_check
      _
    $region7: #{tpu_custom_call.1} parent=1 // pred_check_branch
      %26 = sbr.rel (0) target = $region9
    $region8: #{tpu_custom_call.1} parent=1 // pred_region
      %s28 = ssub.s32 1280, 1280
      %29 = vsyncadd [#allocation7], %s28
      %s30 = sshll.u32 [#allocation6], 4
      %s31 = int_to_ptr.vmem [resolvable:$true] %s30
      %36 = dma.hbm_to_vmem [thread:$0]  %s1, 1280, %s31, [#allocation7], 128, 128, 8
    $region9: #{tpu_custom_call.1} parent=1 // pred_fallthru
      _
    // Predicated region
    $region10: #{tpu_custom_call.1} parent=1 // pred_check
      _
    $region11: #{tpu_custom_call.1} parent=1 // pred_check_branch
      %38 = sbr.rel (0) target = $region13
    $region12: #{tpu_custom_call.1} parent=1 // pred_region
      %s40 = ssub.s32 1280, 1280
      %41 = vsyncadd [#allocation7], %s40
      %s42 = sshll.u32 [#allocation8], 4
      %s43 = int_to_ptr.vmem [resolvable:$true] %s42
      %48 = dma.hbm_to_vmem [thread:$0]  %s2, 1280, %s43, [#allocation7], 128, 128, 8
    $region13: #{tpu_custom_call.1} parent=1 // pred_fallthru
      _
    // Predicated region
    $region14: #{tpu_custom_call.1} parent=1 // pred_check
      _
    $region15: #{tpu_custom_call.1} parent=1 // pred_check_branch
      %50 = sbr.rel (0) target = $region17
    $region16: #{tpu_custom_call.1} parent=1 // pred_region
      %s52 = ssub.s32 16, 16
      %53 = vsyncadd [#allocation5], %s52
      %s55 = sshll.u32 %s3, 4
      %s56 = int_to_ptr.vmem [resolvable:$true] %s55
      %58 = dma.vmem_to_smem %s56, 16, [#allocation9], [#allocation5]
    $region17: #{tpu_custom_call.1} parent=1 // pred_fallthru
      _
    // Predicated region
    $region18: #{tpu_custom_call.1} parent=1 // pred_check
      _
    $region19: #{tpu_custom_call.1} parent=1 // pred_check_branch
      %60 = sbr.rel (0) target = $region21
    $region20: #{tpu_custom_call.1} parent=1 // pred_region
      %s62 = ssub.s32 16, 16
      %63 = vsyncadd [#allocation11], %s62
      %s65 = sshll.u32 %s4, 4
      %s66 = int_to_ptr.vmem [resolvable:$true] %s65
      %68 = dma.vmem_to_smem %s66, 16, [#allocation10], [#allocation11]
    $region21: #{tpu_custom_call.1} parent=1 // pred_fallthru
      _
    // Predicated region
    $region22: #{tpu_custom_call.1} parent=1 // pred_check
      _
    $region23: #{tpu_custom_call.1} parent=1 // pred_check_branch
      %70 = sbr.rel (0) target = $region25
    $region24: #{tpu_custom_call.1} parent=1 // pred_region
      %71 = dma.done [#allocation3], 128
    $region25: #{tpu_custom_call.1} parent=1 // pred_fallthru
      _
    // Predicated region
    $region26: #{tpu_custom_call.1} parent=1 // pred_check
      _
    $region27: #{tpu_custom_call.1} parent=1 // pred_check_branch
      %73 = sbr.rel (0) target = $region29
    $region28: #{tpu_custom_call.1} parent=1 // pred_region
      %74 = dma.done [#allocation7], 1280
    $region29: #{tpu_custom_call.1} parent=1 // pred_fallthru
      _
    // Predicated region
    $region30: #{tpu_custom_call.1} parent=1 // pred_check
      _
    $region31: #{tpu_custom_call.1} parent=1 // pred_check_branch
      %76 = sbr.rel (0) target = $region33
    $region32: #{tpu_custom_call.1} parent=1 // pred_region
      %77 = dma.done [#allocation7], 1280
    $region33: #{tpu_custom_call.1} parent=1 // pred_fallthru
      _
    // Predicated region
    $region34: #{tpu_custom_call.1} parent=1 // pred_check
      _
    $region35: #{tpu_custom_call.1} parent=1 // pred_check_branch
      %79 = sbr.rel (0) target = $region37
    $region36: #{tpu_custom_call.1} parent=1 // pred_region
      %80 = dma.done [#allocation5], 16
    $region37: #{tpu_custom_call.1} parent=1 // pred_fallthru
      _
    // Predicated region
    $region38: #{tpu_custom_call.1} parent=1 // pred_check
      _
    $region39: #{tpu_custom_call.1} parent=1 // pred_check_branch
      %82 = sbr.rel (0) target = $region41
    $region40: #{tpu_custom_call.1} parent=1 // pred_region
      %83 = dma.done [#allocation11], 16
    $region41: #{tpu_custom_call.1} parent=1 // pred_fallthru
      _
    %84 = sfence
    %s85 = sld [smem:[#allocation9]]
    %s86 = sld [smem:[#allocation9 + $0x1]]
    %s87 = sld [smem:[#allocation9 + $0x2]]
    %s88 = sld [smem:[#allocation9 + $0x3]]
    %s89 = sld [smem:[#allocation9 + $0x4]]
    %s90 = sld [smem:[#allocation9 + $0x5]]
    %s91 = sld [smem:[#allocation9 + $0x6]]
    %s92 = sld [smem:[#allocation9 + $0x7]]
    %s93 = sld [smem:[#allocation9 + $0x8]]
    %s94 = sld [smem:[#allocation9 + $0x9]]
    %s95 = sld [smem:[#allocation10]]
    %s96 = sld [smem:[#allocation10 + $0x1]]
    %s97 = sld [smem:[#allocation10 + $0x2]]
    %s98 = sld [smem:[#allocation10 + $0x3]]
    %s99 = sld [smem:[#allocation10 + $0x4]]
    %s100 = sld [smem:[#allocation10 + $0x5]]
    %s101 = sld [smem:[#allocation10 + $0x6]]
    %s102 = sld [smem:[#allocation10 + $0x7]]
    %s103 = sld [smem:[#allocation10 + $0x8]]
    %s104 = sld [smem:[#allocation10 + $0x9]]
    %v105 = vld [vmem:[#allocation6] sm:$0xff]
    %v106 = vld [vmem:[#allocation6 + $0x8] sm:$0xff]
    %v107 = vld [vmem:[#allocation6 + $0x10] sm:$0xff]
    %v108 = vld [vmem:[#allocation6 + $0x18] sm:$0xff]
    %v109 = vld [vmem:[#allocation6 + $0x20] sm:$0xff]
    %v110 = vld [vmem:[#allocation6 + $0x28] sm:$0xff]
    %v111 = vld [vmem:[#allocation6 + $0x30] sm:$0xff]
    %v112 = vld [vmem:[#allocation6 + $0x38] sm:$0xff]
    %v113 = vld [vmem:[#allocation6 + $0x40] sm:$0xff]
    %v114 = vld [vmem:[#allocation6 + $0x48] sm:$0xff]
    %v115 = vld [vmem:[#allocation8] sm:$0xff]
    %v116 = vld [vmem:[#allocation8 + $0x8] sm:$0xff]
    %v117 = vld [vmem:[#allocation8 + $0x10] sm:$0xff]
    %v118 = vld [vmem:[#allocation8 + $0x18] sm:$0xff]
    %v119 = vld [vmem:[#allocation8 + $0x20] sm:$0xff]
    %v120 = vld [vmem:[#allocation8 + $0x28] sm:$0xff]
    %v121 = vld [vmem:[#allocation8 + $0x30] sm:$0xff]
    %v122 = vld [vmem:[#allocation8 + $0x38] sm:$0xff]
    %v123 = vld [vmem:[#allocation8 + $0x40] sm:$0xff]
    %v124 = vld [vmem:[#allocation8 + $0x48] sm:$0xff]
    %v125 = vld [vmem:[#allocation2] sm:$0xff]
    %v126 = vstv %s85
    %v127 = vsub.f32 %v125, %v126
    %v128 = vand.u32 2147483647, %v127
    %v129 = vmul.f32 %v128, %v105
    %v130 = vstv %s86
    %v131 = vsub.f32 %v125, %v130
    %v132 = vand.u32 2147483647, %v131
    %v133 = vmul.f32 %v132, %v106
    %v134 = vadd.f32 %v129, %v133
    %v135 = vstv %s87
    %v136 = vsub.f32 %v125, %v135
    %v137 = vand.u32 2147483647, %v136
    %v138 = vmul.f32 %v137, %v107
    %v139 = vadd.f32 %v134, %v138
    %v140 = vstv %s88
    %v141 = vsub.f32 %v125, %v140
    %v142 = vand.u32 2147483647, %v141
    %v143 = vmul.f32 %v142, %v108
    %v144 = vadd.f32 %v139, %v143
    %v145 = vstv %s89
    %v146 = vsub.f32 %v125, %v145
    %v147 = vand.u32 2147483647, %v146
    %v148 = vmul.f32 %v147, %v109
    %v149 = vadd.f32 %v144, %v148
    %v150 = vstv %s90
    %v151 = vsub.f32 %v125, %v150
    %v152 = vand.u32 2147483647, %v151
    %v153 = vmul.f32 %v152, %v110
    %v154 = vadd.f32 %v149, %v153
    %v155 = vstv %s91
    %v156 = vsub.f32 %v125, %v155
    %v157 = vand.u32 2147483647, %v156
    %v158 = vmul.f32 %v157, %v111
    %v159 = vadd.f32 %v154, %v158
    %v160 = vstv %s92
    %v161 = vsub.f32 %v125, %v160
    %v162 = vand.u32 2147483647, %v161
    %v163 = vmul.f32 %v162, %v112
    %v164 = vadd.f32 %v159, %v163
    %v165 = vstv %s93
    %v166 = vsub.f32 %v125, %v165
    %v167 = vand.u32 2147483647, %v166
    %v168 = vmul.f32 %v167, %v113
    %v169 = vadd.f32 %v164, %v168
    %v170 = vstv %s94
    %v171 = vsub.f32 %v125, %v170
    %v172 = vand.u32 2147483647, %v171
    %v173 = vmul.f32 %v172, %v114
    %v174 = vadd.f32 %v169, %v173
    %v175 = vmul.f32 %v174, 0.5
    %v176 = vmul.f32 %v174, 0.044715
    %v177 = vmul.f32 %v176, %v174
    %v178 = vmul.f32 %v177, %v174
    %v179 = vadd.f32 %v174, %v178
    %v180 = vmul.f32 %v179, 0.7978846
    %v181 = vtanh.pop %v180
    %v182 = vadd.f32 %v181, 1.0
    %v183 = vmul.f32 %v175, %v182
    %v184 = vstv %s95
    %v185 = vsub.f32 %v183, %v184
    %v186 = vand.u32 2147483647, %v185
    %v187 = vmul.f32 %v186, %v115
    %v188 = vstv %s96
    %v189 = vsub.f32 %v183, %v188
    %v190 = vand.u32 2147483647, %v189
    %v191 = vmul.f32 %v190, %v116
    %v192 = vadd.f32 %v187, %v191
    %v193 = vstv %s97
    %v194 = vsub.f32 %v183, %v193
    %v195 = vand.u32 2147483647, %v194
    %v196 = vmul.f32 %v195, %v117
    %v197 = vadd.f32 %v192, %v196
    %v198 = vstv %s98
    %v199 = vsub.f32 %v183, %v198
    %v200 = vand.u32 2147483647, %v199
    %v201 = vmul.f32 %v200, %v118
    %v202 = vadd.f32 %v197, %v201
    %v203 = vstv %s99
    %v204 = vsub.f32 %v183, %v203
    %v205 = vand.u32 2147483647, %v204
    %v206 = vmul.f32 %v205, %v119
    %v207 = vadd.f32 %v202, %v206
    %v208 = vstv %s100
    %v209 = vsub.f32 %v183, %v208
    %v210 = vand.u32 2147483647, %v209
    %v211 = vmul.f32 %v210, %v120
    %v212 = vadd.f32 %v207, %v211
    %v213 = vstv %s101
    %v214 = vsub.f32 %v183, %v213
    %v215 = vand.u32 2147483647, %v214
    %v216 = vmul.f32 %v215, %v121
    %v217 = vadd.f32 %v212, %v216
    %v218 = vstv %s102
    %v219 = vsub.f32 %v183, %v218
    %v220 = vand.u32 2147483647, %v219
    %v221 = vmul.f32 %v220, %v122
    %v222 = vadd.f32 %v217, %v221
    %v223 = vstv %s103
    %v224 = vsub.f32 %v183, %v223
    %v225 = vand.u32 2147483647, %v224
    %v226 = vmul.f32 %v225, %v123
    %v227 = vadd.f32 %v222, %v226
    %v228 = vstv %s104
    %v229 = vsub.f32 %v183, %v228
    %v230 = vand.u32 2147483647, %v229
    %v231 = vmul.f32 %v230, %v124
    %v232 = vadd.f32 %v227, %v231
    %233 = vst [vmem:[#allocation12] sm:$0xff] %v232
    // Predicated region
    $region42: #{tpu_custom_call.1} parent=1 // pred_check
      _
    $region43: #{tpu_custom_call.1} parent=1 // pred_check_branch
      %235 = sbr.rel (0) target = $region45
    $region44: #{tpu_custom_call.1} parent=1 // pred_region
      %s237 = ssub.s32 128, 128
      %238 = vsyncadd [#allocation4], %s237
      %s240 = sshll.u32 [#allocation12], 4
      %s241 = int_to_ptr.vmem [resolvable:$true] %s240
      %243 = dma.vmem_to_hbm [thread:$0]  %s241, 128, %s5, [#allocation4]
    $region45: #{tpu_custom_call.1} parent=1 // pred_fallthru
      _
    // Predicated region
    $region46: #{tpu_custom_call.1} parent=1 // pred_check
      _
    $region47: #{tpu_custom_call.1} parent=1 // pred_check_branch
      %245 = sbr.rel (0) target = $region49
    $region48: #{tpu_custom_call.1} parent=1 // pred_region
      %246 = dma.done [#allocation4], 128
    $region49: #{tpu_custom_call.1} parent=1 // pred_fallthru
      _
    %247 = vsyncpa [#allocation3], 1
    %248 = vsyncpa [#allocation7], 1
    %249 = vsyncpa [#allocation4], 1
    %250 = vsyncpa [#allocation5], 1
    %251 = vsyncpa [#allocation11], 1

</llo_original>
